<compile_context>
chip_gen: v7x
topology: tpu7x:2x2x1
jax: 0.10.0
libtpu: 0.0.40
codegen_flags: <defaults>
</compile_context>

<pallas_src>
import functools

import jax
import jax.numpy as jnp
from jax import lax
from jax.experimental import pallas as pl
from jax.experimental.pallas import tpu as pltpu

# ---------------- model hyper-params (small, consistent with the module) ----
B = 2          # batch
N = 8          # sequence length
D = 32         # model dim
H = 2          # heads (= kv_heads)
DH = 16        # dim_head
D_INNER = H * DH            # = 32
W_FUSED_COLS = 2 * D_INNER + H * D   # [Wq*scale | Wk | Wv_0@Wo_0 | Wv_1@Wo_1] = 128

RMS_SCALE = D ** 0.5
ATTN_SCALE = DH ** -0.5
NORM_EPS = 1e-12   # F.normalize eps semantics: denom = max(||x||_2, eps)


# ---------------------------------------------------------------------------
# kernel
# ---------------------------------------------------------------------------
def _attention_kernel(x_ref, gamma_ref, w_ref, out_ref, *, bb):
    """Fused RMSNorm + QKV(+Wo) projection + multi-head attention.

    One grid step handles `bb` batch elements (rows flattened to bb*N).
      x_ref     : (bb*N, D)
      gamma_ref : (1, D)            gamma * sqrt(D) pre-folded
      w_ref     : (D, 128)          [Wq*Dh^-0.5 | Wk | Wv_h @ Wo_h per head]
      out_ref   : (bb*N, D)
    """
    x = x_ref[...].astype(jnp.float32)                      # (bb*N, D)

    # --- RMSNorm: x / max(||x||, eps) * sqrt(D) * gamma (rsqrt on EUP) ---
    ss = jnp.sum(x * x, axis=-1, keepdims=True)             # (bb*N, 1)
    xn = x * lax.rsqrt(jnp.maximum(ss, NORM_EPS * NORM_EPS)) * gamma_ref[0]

    # --- single fused lane-dense projection (one MXU push, 128-wide) ---
    proj = jnp.dot(xn, w_ref[...],
                   preferred_element_type=jnp.float32)      # (bb*N, 128)

    # --- per (batch, head) scaled dot-product attention (static loops) ---
    for b in range(bb):
        rows = slice(b * N, (b + 1) * N)
        acc = jnp.zeros((N, D), jnp.float32)
        for h in range(H):
            qh = proj[rows, h * DH:(h + 1) * DH]                       # (N, DH), scale folded
            kh = proj[rows, D_INNER + h * DH:D_INNER + (h + 1) * DH]   # (N, DH)
            # contract on DH without materializing kh.T
            s = lax.dot_general(qh, kh, (((1,), (1,)), ((), ())),
                                preferred_element_type=jnp.float32)    # (N, N)
            s = s - jnp.max(s, axis=-1, keepdims=True)
            p = jnp.exp(s)
            p = p * pl.reciprocal(jnp.sum(p, axis=-1, keepdims=True),
                                  approx=True)
            # v' = xn @ (Wv_h @ Wo_h) already computed in proj; accumulate
            vph = proj[rows, 2 * D_INNER + h * D:2 * D_INNER + (h + 1) * D]  # (N, D)
            acc = acc + jnp.dot(p, vph, preferred_element_type=jnp.float32)
        out_ref[pl.ds(b * N, N), :] = acc.astype(out_ref.dtype)


# ---------------------------------------------------------------------------
# parameter prep (done once, outside the kernel / per-call path)
# ---------------------------------------------------------------------------
def prepare_params(gamma, wq, wk, wv, wo):
    """Fold constants and fuse weights.

      gamma_p : (1, D)   = gamma * sqrt(D)
      w_fused : (D, 128) = [Wq * Dh^-0.5 | Wk | Wv_0 @ Wo_0 | Wv_1 @ Wo_1]
    """
    gamma_p = (gamma * RMS_SCALE).reshape(1, D).astype(jnp.float32)
    wq_s = wq * ATTN_SCALE
    wvo = jnp.concatenate(
        [wv[:, h * DH:(h + 1) * DH] @ wo[h * DH:(h + 1) * DH, :] for h in range(H)],
        axis=1)                                              # (D, H*D)
    w_fused = jnp.concatenate([wq_s, wk, wvo], axis=1)       # (D, 128)
    return gamma_p, w_fused.astype(jnp.float32)


def _batch_blocks():
    """1 grid step on single-TC chips (v5e/v6e); 2 parallel steps on v7x."""
    try:
        kind = jax.devices()[0].device_kind.lower()
    except Exception:
        return 1
    if "v7" in kind or "7x" in kind:
        return 2
    return 1


# ---------------------------------------------------------------------------
# wrapper
# ---------------------------------------------------------------------------
def attention_pallas(x, gamma_p, w_fused, *, batch_blocks=None):
    """x: (B, N, D); gamma_p/w_fused from prepare_params()."""
    if batch_blocks is None:
        batch_blocks = _batch_blocks()
    assert B % batch_blocks == 0
    bb = B // batch_blocks

    x2 = x.reshape(B * N, D)                                 # metadata-only reshape
    kernel = functools.partial(_attention_kernel, bb=bb)

    out2 = pl.pallas_call(
        kernel,
        out_shape=jax.ShapeDtypeStruct((B * N, D), x.dtype),
        grid_spec=pltpu.PrefetchScalarGridSpec(
            num_scalar_prefetch=0,
            grid=(batch_blocks,),
            in_specs=[
                pl.BlockSpec((bb * N, D), lambda i: (i, 0)),             # x (rows)
                pl.BlockSpec((1, D), lambda i: (0, 0)),                  # gamma*sqrt(D)
                pl.BlockSpec((D, W_FUSED_COLS), lambda i: (0, 0)),       # fused weights
            ],
            out_specs=pl.BlockSpec((bb * N, D), lambda i: (i, 0)),
        ),
        compiler_params=pltpu.CompilerParams(
            dimension_semantics=("parallel",)),
    )(x2, gamma_p, w_fused)
    return out2.reshape(B, N, D)


# ---------------------------------------------------------------------------
# pure-JAX reference (uses the ORIGINAL, un-fused parameters)
# ---------------------------------------------------------------------------
def attention_reference(x, gamma, wq, wk, wv, wo):
    l2 = jnp.sqrt(jnp.sum(x * x, axis=-1, keepdims=True))
    xn = x / jnp.maximum(l2, NORM_EPS) * RMS_SCALE * gamma
    q = (xn @ wq).reshape(B, N, H, DH).transpose(0, 2, 1, 3)   # b h n d
    k = (xn @ wk).reshape(B, N, H, DH).transpose(0, 2, 1, 3)
    v = (xn @ wv).reshape(B, N, H, DH).transpose(0, 2, 1, 3)
    s = jnp.einsum('bhnd,bhmd->bhnm', q, k) * ATTN_SCALE
    p = jax.nn.softmax(s, axis=-1)
    o = jnp.einsum('bhnm,bhmd->bhnd', p, v)
    o = o.transpose(0, 2, 1, 3).reshape(B, N, H * DH)
    return o @ wo


if __name__ == "__main__":
    key = jax.random.PRNGKey(0)
    kx, kg, kq, kkv, ko = jax.random.split(key, 5)

    x = jax.random.normal(kx, (B, N, D), dtype=jnp.float32)

    # Parameters (deterministic init; shapes match nn.Module __init__):
    #   RMSNorm.gamma : (D,)
    #   to_q weight   : (H*DH, D)      -> stored transposed (D, H*DH)
    #   to_kv weight  : (2*H*DH, D)    -> split into Wk, Wv, stored (D, H*DH)
    #   to_out weight : (D, H*DH)      -> stored transposed (H*DH, D)
    gamma = jnp.ones((D,), jnp.float32) + 0.01 * jax.random.normal(kg, (D,))
    wq = 0.1 * jax.random.normal(kq, (D, D_INNER), dtype=jnp.float32)
    wkv = 0.1 * jax.random.normal(kkv, (D, 2 * D_INNER), dtype=jnp.float32)
    wk, wv = wkv[:, :D_INNER], wkv[:, D_INNER:]
    wo = 0.1 * jax.random.normal(ko, (D_INNER, D), dtype=jnp.float32)

    # one-time parameter fusion / constant folding (outside the kernel)
    gamma_p, w_fused = prepare_params(gamma, wq, wk, wv, wo)

    out = attention_pallas(x, gamma_p, w_fused)
    out = jax.block_until_ready(out)

    ref = attention_reference(x, gamma, wq, wk, wv, wo)
    assert out.shape == (B, N, D)
    # approx reciprocal (EUP) + Wo reassociation -> slightly looser tolerance
    assert jnp.allclose(out, ref, rtol=2e-3, atol=2e-3), "mismatch vs reference"

    # TODO(synk): cache / context / rotary / null-kv / mask / dropout branches
    # of the PyTorch forward are not exercised in this synthetic kernel.
    print("KERNEL_OK")
</pallas_src>

<mosaic_0001>
module attributes {stable_mosaic.version = 11 : i64} {
  func.func @_attention_kernel(%arg0: i32, %arg1: memref<16x32xf32, #tpu.memory_space<vmem>>, %arg2: memref<1x32xf32, #tpu.memory_space<vmem>>, %arg3: memref<32x128xf32, #tpu.memory_space<vmem>>, %arg4: memref<16x32xf32, #tpu.memory_space<vmem>>) attributes {dimension_semantics = [#tpu.dimension_semantics<parallel>], iteration_bounds = array<i64: 1>, scalar_prefetch = 0 : i64, scratch_operands = 0 : i64, tpu.core_type = #tpu.core_type<tc>, window_params = [{transform_indices = @transform_0, window_bounds = array<i64: 16, 32>}, {pipeline_mode = #tpu.pipeline_mode<synchronous>, transform_indices = @transform_1, window_bounds = array<i64: 1, 32>}, {pipeline_mode = #tpu.pipeline_mode<synchronous>, transform_indices = @transform_2, window_bounds = array<i64: 32, 128>}, {transform_indices = @transform_3, window_bounds = array<i64: 16, 32>}]} {
    %c0 = arith.constant 0 : index
    %c0_0 = arith.constant 0 : index
    %0 = vector.load %arg1[%c0, %c0_0] : memref<16x32xf32, #tpu.memory_space<vmem>>, vector<16x32xf32>
    %1 = arith.mulf %0, %0 : vector<16x32xf32>
    %cst = arith.constant dense<0.000000e+00> : vector<16xf32>
    %2 = vector.multi_reduction <add>, %1, %cst [1] : vector<16x32xf32> to vector<16xf32>
    %3 = vector.shape_cast %2 : vector<16xf32> to vector<16x1xf32>
    %cst_1 = arith.constant 1.000000e-24 : f32
    %4 = vector.broadcast %cst_1 : f32 to vector<16x1xf32>
    %5 = arith.maximumf %3, %4 : vector<16x1xf32>
    %6 = math.rsqrt %5 : vector<16x1xf32>
    %7 = vector.broadcast %6 : vector<16x1xf32> to vector<16x32xf32>
    %8 = arith.mulf %0, %7 : vector<16x32xf32>
    %c0_2 = arith.constant 0 : index
    %c0_3 = arith.constant 0 : index
    %9 = vector.load %arg2[%c0_2, %c0_3] : memref<1x32xf32, #tpu.memory_space<vmem>>, vector<1x32xf32>
    %10 = vector.shape_cast %9 : vector<1x32xf32> to vector<32xf32>
    %11 = vector.shape_cast %10 : vector<32xf32> to vector<1x32xf32>
    %12 = vector.broadcast %11 : vector<1x32xf32> to vector<16x32xf32>
    %13 = arith.mulf %8, %12 : vector<16x32xf32>
    %c0_4 = arith.constant 0 : index
    %c0_5 = arith.constant 0 : index
    %14 = vector.load %arg3[%c0_4, %c0_5] : memref<32x128xf32, #tpu.memory_space<vmem>>, vector<32x128xf32>
    %cst_6 = arith.constant dense<0.000000e+00> : vector<16x128xf32>
    %15 = tpu.matmul %13, %14, %cst_6 {dimension_numbers = #tpu.dot_dimension_numbers<[1], [0], [0], [1], [0, 0, 1, 1], [], []>} : vector<16x32xf32>, vector<32x128xf32>, vector<16x128xf32> -> vector<16x128xf32>
    %cst_7 = arith.constant 0.000000e+00 : f32
    %16 = vector.broadcast %cst_7 : f32 to vector<8x32xf32>
    %17 = vector.extract_strided_slice %15 {offsets = [0, 0], sizes = [8, 16], strides = [1, 1]} : vector<16x128xf32> to vector<8x16xf32>
    %18 = vector.extract_strided_slice %15 {offsets = [0, 32], sizes = [8, 16], strides = [1, 1]} : vector<16x128xf32> to vector<8x16xf32>
    %cst_8 = arith.constant dense<0.000000e+00> : vector<8x8xf32>
    %19 = tpu.matmul %17, %18, %cst_8 {dimension_numbers = #tpu.dot_dimension_numbers<[1], [1], [0], [0], [0, 0, 1, 0], [], []>} : vector<8x16xf32>, vector<8x16xf32>, vector<8x8xf32> -> vector<8x8xf32>
    %cst_9 = arith.constant dense<0xFF800000> : vector<8xf32>
    %20 = vector.multi_reduction <maximumf>, %19, %cst_9 [1] : vector<8x8xf32> to vector<8xf32>
    %21 = vector.shape_cast %20 : vector<8xf32> to vector<8x1xf32>
    %22 = vector.broadcast %21 : vector<8x1xf32> to vector<8x8xf32>
    %23 = arith.subf %19, %22 : vector<8x8xf32>
    %24 = math.exp %23 : vector<8x8xf32>
    %cst_10 = arith.constant dense<0.000000e+00> : vector<8xf32>
    %25 = vector.multi_reduction <add>, %24, %cst_10 [1] : vector<8x8xf32> to vector<8xf32>
    %26 = vector.shape_cast %25 : vector<8xf32> to vector<8x1xf32>
    %27 = tpu.reciprocal %26 {approx = true} : vector<8x1xf32> -> vector<8x1xf32>
    %28 = vector.broadcast %27 : vector<8x1xf32> to vector<8x8xf32>
    %29 = arith.mulf %24, %28 : vector<8x8xf32>
    %30 = vector.extract_strided_slice %15 {offsets = [0, 64], sizes = [8, 32], strides = [1, 1]} : vector<16x128xf32> to vector<8x32xf32>
    %cst_11 = arith.constant dense<0.000000e+00> : vector<8x32xf32>
    %31 = tpu.matmul %29, %30, %cst_11 {dimension_numbers = #tpu.dot_dimension_numbers<[1], [0], [0], [1], [0, 0, 1, 1], [], []>} : vector<8x8xf32>, vector<8x32xf32>, vector<8x32xf32> -> vector<8x32xf32>
    %32 = arith.addf %16, %31 : vector<8x32xf32>
    %33 = vector.extract_strided_slice %15 {offsets = [0, 16], sizes = [8, 16], strides = [1, 1]} : vector<16x128xf32> to vector<8x16xf32>
    %34 = vector.extract_strided_slice %15 {offsets = [0, 48], sizes = [8, 16], strides = [1, 1]} : vector<16x128xf32> to vector<8x16xf32>
    %cst_12 = arith.constant dense<0.000000e+00> : vector<8x8xf32>
    %35 = tpu.matmul %33, %34, %cst_12 {dimension_numbers = #tpu.dot_dimension_numbers<[1], [1], [0], [0], [0, 0, 1, 0], [], []>} : vector<8x16xf32>, vector<8x16xf32>, vector<8x8xf32> -> vector<8x8xf32>
    %cst_13 = arith.constant dense<0xFF800000> : vector<8xf32>
    %36 = vector.multi_reduction <maximumf>, %35, %cst_13 [1] : vector<8x8xf32> to vector<8xf32>
    %37 = vector.shape_cast %36 : vector<8xf32> to vector<8x1xf32>
    %38 = vector.broadcast %37 : vector<8x1xf32> to vector<8x8xf32>
    %39 = arith.subf %35, %38 : vector<8x8xf32>
    %40 = math.exp %39 : vector<8x8xf32>
    %cst_14 = arith.constant dense<0.000000e+00> : vector<8xf32>
    %41 = vector.multi_reduction <add>, %40, %cst_14 [1] : vector<8x8xf32> to vector<8xf32>
    %42 = vector.shape_cast %41 : vector<8xf32> to vector<8x1xf32>
    %43 = tpu.reciprocal %42 {approx = true} : vector<8x1xf32> -> vector<8x1xf32>
    %44 = vector.broadcast %43 : vector<8x1xf32> to vector<8x8xf32>
    %45 = arith.mulf %40, %44 : vector<8x8xf32>
    %46 = vector.extract_strided_slice %15 {offsets = [0, 96], sizes = [8, 32], strides = [1, 1]} : vector<16x128xf32> to vector<8x32xf32>
    %cst_15 = arith.constant dense<0.000000e+00> : vector<8x32xf32>
    %47 = tpu.matmul %45, %46, %cst_15 {dimension_numbers = #tpu.dot_dimension_numbers<[1], [0], [0], [1], [0, 0, 1, 1], [], []>} : vector<8x8xf32>, vector<8x32xf32>, vector<8x32xf32> -> vector<8x32xf32>
    %48 = arith.addf %32, %47 : vector<8x32xf32>
    %c0_16 = arith.constant 0 : index
    %c0_17 = arith.constant 0 : index
    %49 = vector.load %arg4[%c0_16, %c0_17] : memref<16x32xf32, #tpu.memory_space<vmem>>, vector<8x32xf32>
    tpu.vector_store %arg4[%c0_16, %c0_17], %48 {strides = array<i32>} : memref<16x32xf32, #tpu.memory_space<vmem>>, vector<8x32xf32>,
    %cst_18 = arith.constant 0.000000e+00 : f32
    %50 = vector.broadcast %cst_18 : f32 to vector<8x32xf32>
    %51 = vector.extract_strided_slice %15 {offsets = [8, 0], sizes = [8, 16], strides = [1, 1]} : vector<16x128xf32> to vector<8x16xf32>
    %52 = vector.extract_strided_slice %15 {offsets = [8, 32], sizes = [8, 16], strides = [1, 1]} : vector<16x128xf32> to vector<8x16xf32>
    %cst_19 = arith.constant dense<0.000000e+00> : vector<8x8xf32>
    %53 = tpu.matmul %51, %52, %cst_19 {dimension_numbers = #tpu.dot_dimension_numbers<[1], [1], [0], [0], [0, 0, 1, 0], [], []>} : vector<8x16xf32>, vector<8x16xf32>, vector<8x8xf32> -> vector<8x8xf32>
    %cst_20 = arith.constant dense<0xFF800000> : vector<8xf32>
    %54 = vector.multi_reduction <maximumf>, %53, %cst_20 [1] : vector<8x8xf32> to vector<8xf32>
    %55 = vector.shape_cast %54 : vector<8xf32> to vector<8x1xf32>
    %56 = vector.broadcast %55 : vector<8x1xf32> to vector<8x8xf32>
    %57 = arith.subf %53, %56 : vector<8x8xf32>
    %58 = math.exp %57 : vector<8x8xf32>
    %cst_21 = arith.constant dense<0.000000e+00> : vector<8xf32>
    %59 = vector.multi_reduction <add>, %58, %cst_21 [1] : vector<8x8xf32> to vector<8xf32>
    %60 = vector.shape_cast %59 : vector<8xf32> to vector<8x1xf32>
    %61 = tpu.reciprocal %60 {approx = true} : vector<8x1xf32> -> vector<8x1xf32>
    %62 = vector.broadcast %61 : vector<8x1xf32> to vector<8x8xf32>
    %63 = arith.mulf %58, %62 : vector<8x8xf32>
    %64 = vector.extract_strided_slice %15 {offsets = [8, 64], sizes = [8, 32], strides = [1, 1]} : vector<16x128xf32> to vector<8x32xf32>
    %cst_22 = arith.constant dense<0.000000e+00> : vector<8x32xf32>
    %65 = tpu.matmul %63, %64, %cst_22 {dimension_numbers = #tpu.dot_dimension_numbers<[1], [0], [0], [1], [0, 0, 1, 1], [], []>} : vector<8x8xf32>, vector<8x32xf32>, vector<8x32xf32> -> vector<8x32xf32>
    %66 = arith.addf %50, %65 : vector<8x32xf32>
    %67 = vector.extract_strided_slice %15 {offsets = [8, 16], sizes = [8, 16], strides = [1, 1]} : vector<16x128xf32> to vector<8x16xf32>
    %68 = vector.extract_strided_slice %15 {offsets = [8, 48], sizes = [8, 16], strides = [1, 1]} : vector<16x128xf32> to vector<8x16xf32>
    %cst_23 = arith.constant dense<0.000000e+00> : vector<8x8xf32>
    %69 = tpu.matmul %67, %68, %cst_23 {dimension_numbers = #tpu.dot_dimension_numbers<[1], [1], [0], [0], [0, 0, 1, 0], [], []>} : vector<8x16xf32>, vector<8x16xf32>, vector<8x8xf32> -> vector<8x8xf32>
    %cst_24 = arith.constant dense<0xFF800000> : vector<8xf32>
    %70 = vector.multi_reduction <maximumf>, %69, %cst_24 [1] : vector<8x8xf32> to vector<8xf32>
    %71 = vector.shape_cast %70 : vector<8xf32> to vector<8x1xf32>
    %72 = vector.broadcast %71 : vector<8x1xf32> to vector<8x8xf32>
    %73 = arith.subf %69, %72 : vector<8x8xf32>
    %74 = math.exp %73 : vector<8x8xf32>
    %cst_25 = arith.constant dense<0.000000e+00> : vector<8xf32>
    %75 = vector.multi_reduction <add>, %74, %cst_25 [1] : vector<8x8xf32> to vector<8xf32>
    %76 = vector.shape_cast %75 : vector<8xf32> to vector<8x1xf32>
    %77 = tpu.reciprocal %76 {approx = true} : vector<8x1xf32> -> vector<8x1xf32>
    %78 = vector.broadcast %77 : vector<8x1xf32> to vector<8x8xf32>
    %79 = arith.mulf %74, %78 : vector<8x8xf32>
    %80 = vector.extract_strided_slice %15 {offsets = [8, 96], sizes = [8, 32], strides = [1, 1]} : vector<16x128xf32> to vector<8x32xf32>
    %cst_26 = arith.constant dense<0.000000e+00> : vector<8x32xf32>
    %81 = tpu.matmul %79, %80, %cst_26 {dimension_numbers = #tpu.dot_dimension_numbers<[1], [0], [0], [1], [0, 0, 1, 1], [], []>} : vector<8x8xf32>, vector<8x32xf32>, vector<8x32xf32> -> vector<8x32xf32>
    %82 = arith.addf %66, %81 : vector<8x32xf32>
    %c8 = arith.constant 8 : index
    %c0_27 = arith.constant 0 : index
    %83 = vector.load %arg4[%c8, %c0_27] : memref<16x32xf32, #tpu.memory_space<vmem>>, vector<8x32xf32>
    tpu.vector_store %arg4[%c8, %c0_27], %82 {strides = array<i32>} : memref<16x32xf32, #tpu.memory_space<vmem>>, vector<8x32xf32>,
    return
  }
  func.func @transform_0(%arg0: i32) -> (i32, i32) {
    %c0_i32 = arith.constant 0 : i32
    %c0_i32_0 = arith.constant 0 : i32
    return %arg0, %c0_i32 : i32, i32
  }
  func.func @transform_1(%arg0: i32) -> (i32, i32) {
    %c0_i32 = arith.constant 0 : i32
    %c0_i32_0 = arith.constant 0 : i32
    %c0_i32_1 = arith.constant 0 : i32
    return %c0_i32, %c0_i32_0 : i32, i32
  }
  func.func @transform_2(%arg0: i32) -> (i32, i32) {
    %c0_i32 = arith.constant 0 : i32
    %c0_i32_0 = arith.constant 0 : i32
    %c0_i32_1 = arith.constant 0 : i32
    return %c0_i32, %c0_i32_0 : i32, i32
  }
  func.func @transform_3(%arg0: i32) -> (i32, i32) {
    %c0_i32 = arith.constant 0 : i32
    %c0_i32_0 = arith.constant 0 : i32
    return %arg0, %c0_i32 : i32, i32
  }
}

</mosaic_0001>

<llo_original>
// kernel: tpu_custom_call.1
$region0: #{tpu_custom_call.1}
  #allocation0 [shape = 'u32[]', space=smem, size = 0x4, offset = 0x4, fixed_abs, tag = 'smem constant byte address 0x4 - core index']
  #allocation1 [shape = 'u32[144,128]{1,0:T(1,128)}', space=vmem, size = 0x12000, scoped, tag = 'internal scratch']
  %s0 = inlined_call_operand.hbm [shape: f32[16,32], index: 0, kind: input, shape index: {}]
  %s1 = inlined_call_operand.vmem [shape: f32[1,32], index: 1, kind: input, shape index: {}]
  %s2 = inlined_call_operand.hbm [shape: f32[32,128], index: 2, kind: input, shape index: {}]
  %s3 = inlined_call_operand.hbm [shape: f32[16,32], index: 3, kind: output, shape index: {}]
  %s4 = sld [smem:[#allocation0]]
  $region30: #{tpu_custom_call.1} parent=0
    _
  %s6 = ssub.s32 1, %s4
  %s7 = scalar_select 0, %s6, %s4
  $region1: #{tpu_custom_call.1} parent=0
    #allocation2 [shape = 'u8[8192]{0}', space=vmem, size = 0x2000, scoped, tag = 'input window, operand 0, single buffered']
    #allocation3 [shape = 's32[1]{0}', space=sflag, size = 0x4, scoped, tag = 'scoped memory for tpu_custom_call.1']
    #allocation4 [shape = 's32[1]{0}', space=sflag, size = 0x4, scoped, tag = 'scoped memory for tpu_custom_call.1']
    #allocation5 [shape = 'u8[16384]{0}', space=vmem, size = 0x4000, scoped, tag = 'input window, operand 2, single buffered']
    #allocation6 [shape = 's32[1]{0}', space=sflag, size = 0x4, scoped, tag = 'scoped memory for tpu_custom_call.1']
    #allocation7 [shape = 'u8[8192]{0}', space=vmem, size = 0x2000, scoped, tag = 'output window, operand 0, single buffered']
    %8 = vsyncpa [#allocation3], 0
    %9 = vsyncpa [#allocation6], 0
    %10 = vsyncpa [#allocation4], 0
    // Predicated region
    $region2: #{tpu_custom_call.1} parent=1 // pred_check
      _
    $region3: #{tpu_custom_call.1} parent=1 // pred_check_branch
      %12 = sbr.rel (0) target = $region5
    $region4: #{tpu_custom_call.1} parent=1 // pred_region
      %s14 = ssub.s32 256, 256
      %15 = vsyncadd [#allocation3], %s14
      %s16 = sshll.u32 [#allocation2], 4
      %s17 = int_to_ptr.vmem [resolvable:$true] %s16
      %22 = dma.hbm_to_vmem [thread:$0]  %s0, 256, %s17, [#allocation3], 128, 128, 8
    $region5: #{tpu_custom_call.1} parent=1 // pred_fallthru
      _
    // Predicated region
    $region6: #{tpu_custom_call.1} parent=1 // pred_check
      _
    $region7: #{tpu_custom_call.1} parent=1 // pred_check_branch
      %24 = sbr.rel (0) target = $region9
    $region8: #{tpu_custom_call.1} parent=1 // pred_region
      _
    $region9: #{tpu_custom_call.1} parent=1 // pred_fallthru
      _
    // Predicated region
    $region10: #{tpu_custom_call.1} parent=1 // pred_check
      _
    $region11: #{tpu_custom_call.1} parent=1 // pred_check_branch
      %26 = sbr.rel (0) target = $region13
    $region12: #{tpu_custom_call.1} parent=1 // pred_region
      %s28 = ssub.s32 512, 512
      %29 = vsyncadd [#allocation6], %s28
      %s30 = sshll.u32 [#allocation5], 4
      %s31 = int_to_ptr.vmem [resolvable:$true] %s30
      %36 = dma.hbm_to_vmem [thread:$0]  %s2, 512, %s31, [#allocation6], 128, 128, 8
    $region13: #{tpu_custom_call.1} parent=1 // pred_fallthru
      _
    // Predicated region
    $region14: #{tpu_custom_call.1} parent=1 // pred_check
      _
    $region15: #{tpu_custom_call.1} parent=1 // pred_check_branch
      %38 = sbr.rel (0) target = $region17
    $region16: #{tpu_custom_call.1} parent=1 // pred_region
      %39 = dma.done [#allocation3], 256
    $region17: #{tpu_custom_call.1} parent=1 // pred_fallthru
      _
    // Predicated region
    $region18: #{tpu_custom_call.1} parent=1 // pred_check
      _
    $region19: #{tpu_custom_call.1} parent=1 // pred_check_branch
      %41 = sbr.rel (0) target = $region21
    $region20: #{tpu_custom_call.1} parent=1 // pred_region
      %42 = dma.done [#allocation6], 512
    $region21: #{tpu_custom_call.1} parent=1 // pred_fallthru
      _
    %v43 = vld [vmem:[#allocation2] sm:$0xff]
    %v44 = vld [vmem:[#allocation2 + $0x8] sm:$0xff]
    %v45 = vmul.f32 %v43, %v43
    %v46 = vmul.f32 %v44, %v44
    %vm47 = vcmask 261120
    %v48 = vsel %vm47, %v45, 0.0
    %49 = vadd.xlane.f32.xlu0 %v48
    %v50 = vpop.xlane.xlu0 %49
    %v51 = vsel %vm47, %v46, 0.0
    %52 = vadd.xlane.f32.xlu0 %v51
    %v53 = vpop.xlane.xlu0 %52
    %v54 = vmax.f32 %v50, 1e-24
    %v55 = vmax.f32 %v53, 1e-24
    %v56 = vrsqrt.pop %v54
    %v57 = vrsqrt.pop %v55
    %v58 = vmul.f32 %v43, %v56
    %v59 = vmul.f32 %v44, %v57
    %v60 = vld [vmem:[%s1] sm:$0x1]
    %v62 = vlaneseq
    %v63 = vshrl.u32 %v62, 7
    %v64 = vsub.s32 0, %v63
    %v65 = vrot.slane %v60, %v64
    %v67 = vmul.f32 %v58, %v65
    %v68 = vmul.f32 %v59, %v65
    %v69 = vld [vmem:[#allocation5] sm:$0xff]
    %v70 = vld [vmem:[#allocation5 + $0x8] sm:$0xff]
    %v71 = vld [vmem:[#allocation5 + $0x10] sm:$0xff]
    %v72 = vld [vmem:[#allocation5 + $0x18] sm:$0xff]
    %v74 = vsel %vm47, %v67, 0
    %v77 = vsel %vm47, %v68, 0
    %79 = vmatprep.subr.mxu0 0.0
    %80 = vmatpush1.msra.mxu0 %v69
    %81 = vmatprep.subr.mxu0 0.0
    %82 = vmatpush1.msra.mxu0 %v70
    %83 = vmatprep.subr.mxu0 0.0
    %84 = vmatpush1.msra.mxu0 %v71
    %85 = vmatprep.subr.mxu0 0.0
    %86 = vmatpush1.msra.mxu0 %v72
    %87 = vmatprep.subr.mxu0 0.0
    %88 = vmatpush1.msra.mxu0 0.0
    %89 = vmatprep.subr.mxu0 0.0
    %90 = vmatpush1.msra.mxu0 0.0
    %91 = vmatprep.subr.mxu0 0.0
    %92 = vmatpush1.msra.mxu0 0.0
    %93 = vmatprep.subr.mxu0 0.0
    %94 = vmatpush1.msra.mxu0 0.0
    %95 = vmatprep.subr.mxu0 0.0
    %96 = vmatpush1.msra.mxu0 0.0
    %97 = vmatprep.subr.mxu0 0.0
    %98 = vmatpush1.msra.mxu0 0.0
    %99 = vmatprep.subr.mxu0 0.0
    %100 = vmatpush1.msra.mxu0 0.0
    %101 = vmatprep.subr.mxu0 0.0
    %102 = vmatpush1.msra.mxu0 0.0
    %103 = vmatprep.subr.mxu0 0.0
    %104 = vmatpush1.msra.mxu0 0.0
    %105 = vmatprep.subr.mxu0 0.0
    %106 = vmatpush1.msra.mxu0 0.0
    %107 = vmatprep.subr.mxu0 0.0
    %108 = vmatpush1.msra.mxu0 0.0
    %109 = vmatprep.subr.mxu0 0.0
    %110 = vmatpush1.msra.mxu0 0.0
    %111 = vmatprep.subr.mxu0 0.0
    %112 = vmatpush1.msra.mxu0 0.0
    %113 = vmatprep.subr.mxu0 0.0
    %114 = vmatpush1.msra.mxu0 0.0
    %115 = vmatprep.subr.mxu0 0.0
    %116 = vmatpush1.msra.mxu0 0.0
    %117 = vmatprep.subr.mxu0 0.0
    %118 = vmatpush1.msra.mxu0 0.0
    %119 = vmatprep.subr.mxu0 0.0
    %120 = vmatpush1.msra.mxu0 0.0
    %121 = vmatprep.subr.mxu0 0.0
    %122 = vmatpush1.msra.mxu0 0.0
    %123 = vmatprep.subr.mxu0 0.0
    %124 = vmatpush1.msra.mxu0 0.0
    %125 = vmatprep.subr.mxu0 0.0
    %126 = vmatpush1.msra.mxu0 0.0
    %127 = vmatprep.subr.mxu0 0.0
    %128 = vmatpush1.msra.mxu0 0.0
    %129 = vmatprep.subr.mxu0 0.0
    %130 = vmatpush1.msra.mxu0 0.0
    %131 = vmatprep.subr.mxu0 0.0
    %132 = vmatpush1.msra.mxu0 0.0
    %133 = vmatprep.subr.mxu0 0.0
    %134 = vmatpush1.msra.mxu0 0.0
    %135 = vmatprep.subr.mxu0 0.0
    %136 = vmatpush1.msra.mxu0 0.0
    %137 = vmatprep.subr.mxu0 0.0
    %138 = vmatpush1.msra.mxu0 0.0
    %139 = vmatprep.subr.mxu0 0.0
    %140 = vmatpush1.msra.mxu0 0.0
    %141 = vmatprep.subr.mxu0 0.0
    %142 = vmatpush1.msra.mxu0 0.0
    %143 = vmatprep.mubr.f32.mxu0 0.0
    %144 = vmatmul.mubr.f32.gmra.mrb[0].mxu0 %v74
    %v145 = vpop.f32.mrb[0].mxu0
    %v146 = vadd.f32 0.0, %v145
    %v147 = vpop.f32.mrb[0].mxu0
    %148 = vmatprep.mubr.f32.mxu0 0.0
    %149 = vmatmul.mubr.f32.gmra.mrb[0].mxu0 %v77
    %v150 = vpop.f32.mrb[0].mxu0
    %v151 = vadd.f32 0.0, %v150
    %v152 = vpop.f32.mrb[0].mxu0
    %153 = vdwg.mxu0
    %155 = vrot.lane.b32.xlu0 %v146, 96
    %v156 = vpop.permute.xlu0 %155
    %vm157 = vcmask 130048
    %v158 = vsel %vm157, %v146, 0
    %v160 = vsel %vm157, %v156, 0
    %162 = vmatprep.subr.mxu0 0.0
    %163 = vmatpush1.xpose.msra.mxu0 %v160
    %164 = vmatprep.subr.mxu0 0.0
    %165 = vmatpush1.xpose.msra.mxu0 0.0
    %166 = vmatprep.subr.mxu0 0.0
    %167 = vmatpush1.xpose.msra.mxu0 0.0
    %168 = vmatprep.subr.mxu0 0.0
    %169 = vmatpush1.xpose.msra.mxu0 0.0
    %170 = vmatprep.subr.mxu0 0.0
    %171 = vmatpush1.xpose.msra.mxu0 0.0
    %172 = vmatprep.subr.mxu0 0.0
    %173 = vmatpush1.xpose.msra.mxu0 0.0
    %174 = vmatprep.subr.mxu0 0.0
    %175 = vmatpush1.xpose.msra.mxu0 0.0
    %176 = vmatprep.subr.mxu0 0.0
    %177 = vmatpush1.xpose.msra.mxu0 0.0
    %178 = vmatprep.subr.mxu0 0.0
    %179 = vmatpush1.xpose.msra.mxu0 0.0
    %180 = vmatprep.subr.mxu0 0.0
    %181 = vmatpush1.xpose.msra.mxu0 0.0
    %182 = vmatprep.subr.mxu0 0.0
    %183 = vmatpush1.xpose.msra.mxu0 0.0
    %184 = vmatprep.subr.mxu0 0.0
    %185 = vmatpush1.xpose.msra.mxu0 0.0
    %186 = vmatprep.subr.mxu0 0.0
    %187 = vmatpush1.xpose.msra.mxu0 0.0
    %188 = vmatprep.subr.mxu0 0.0
    %189 = vmatpush1.xpose.msra.mxu0 0.0
    %190 = vmatprep.subr.mxu0 0.0
    %191 = vmatpush1.xpose.msra.mxu0 0.0
    %192 = vmatprep.subr.mxu0 0.0
    %193 = vmatpush1.xpose.msra.mxu0 0.0
    %194 = vmatprep.subr.mxu0 0.0
    %195 = vmatpush1.xpose.msra.mxu0 0.0
    %196 = vmatprep.subr.mxu0 0.0
    %197 = vmatpush1.xpose.msra.mxu0 0.0
    %198 = vmatprep.subr.mxu0 0.0
    %199 = vmatpush1.xpose.msra.mxu0 0.0
    %200 = vmatprep.subr.mxu0 0.0
    %201 = vmatpush1.xpose.msra.mxu0 0.0
    %202 = vmatprep.subr.mxu0 0.0
    %203 = vmatpush1.xpose.msra.mxu0 0.0
    %204 = vmatprep.subr.mxu0 0.0
    %205 = vmatpush1.xpose.msra.mxu0 0.0
    %206 = vmatprep.subr.mxu0 0.0
    %207 = vmatpush1.xpose.msra.mxu0 0.0
    %208 = vmatprep.subr.mxu0 0.0
    %209 = vmatpush1.xpose.msra.mxu0 0.0
    %210 = vmatprep.subr.mxu0 0.0
    %211 = vmatpush1.xpose.msra.mxu0 0.0
    %212 = vmatprep.subr.mxu0 0.0
    %213 = vmatpush1.xpose.msra.mxu0 0.0
    %214 = vmatprep.subr.mxu0 0.0
    %215 = vmatpush1.xpose.msra.mxu0 0.0
    %216 = vmatprep.subr.mxu0 0.0
    %217 = vmatpush1.xpose.msra.mxu0 0.0
    %218 = vmatprep.subr.mxu0 0.0
    %219 = vmatpush1.xpose.msra.mxu0 0.0
    %220 = vmatprep.subr.mxu0 0.0
    %221 = vmatpush1.xpose.msra.mxu0 0.0
    %222 = vmatprep.subr.mxu0 0.0
    %223 = vmatpush1.xpose.msra.mxu0 0.0
    %224 = vmatprep.subr.mxu0 0.0
    %225 = vmatpush1.xpose.msra.mxu0 0.0
    %226 = vmatprep.mubr.f32.mxu0 0.0
    %227 = vmatmul.mubr.f32.gmra.mrb[0].mxu0 %v158
    %v228 = vpop.f32.mrb[0].mxu0
    %v229 = vadd.f32 0.0, %v228
    %v230 = vpop.f32.mrb[0].mxu0
    %231 = vdwg.mxu0
    %vm232 = vcmask 64512
    %v233 = vsel %vm232, %v229, -inf
    %234 = vmax.xlane.f32.xlu0 %v233
    %v235 = vpop.xlane.xlu0 %234
    %v236 = vsub.f32 %v229, %v235
    %v237 = vmul.f32 %v236, 1.442695
    %v238 = vpow.pop %v237
    %v239 = vsel %vm232, %v238, 0.0
    %240 = vadd.xlane.f32.xlu0 %v239
    %v241 = vpop.xlane.xlu0 %240
    %v242 = vrcp.pop %v241
    %v243 = vmul.f32 %v238, %v242
    %244 = vrot.lane.b32.xlu0 %v146, 112
    %v245 = vpop.permute.xlu0 %244
    %246 = vrot.lane.b32.xlu0 %v146, 80
    %v247 = vpop.permute.xlu0 %246
    %v248 = vsel %vm157, %v245, 0
    %v250 = vsel %vm157, %v247, 0
    %252 = vmatprep.subr.mxu0 0.0
    %253 = vmatpush1.xpose.msra.mxu0 %v250
    %254 = vmatprep.subr.mxu0 0.0
    %255 = vmatpush1.xpose.msra.mxu0 0.0
    %256 = vmatprep.subr.mxu0 0.0
    %257 = vmatpush1.xpose.msra.mxu0 0.0
    %258 = vmatprep.subr.mxu0 0.0
    %259 = vmatpush1.xpose.msra.mxu0 0.0
    %260 = vmatprep.subr.mxu0 0.0
    %261 = vmatpush1.xpose.msra.mxu0 0.0
    %262 = vmatprep.subr.mxu0 0.0
    %263 = vmatpush1.xpose.msra.mxu0 0.0
    %264 = vmatprep.subr.mxu0 0.0
    %265 = vmatpush1.xpose.msra.mxu0 0.0
    %266 = vmatprep.subr.mxu0 0.0
    %267 = vmatpush1.xpose.msra.mxu0 0.0
    %268 = vmatprep.subr.mxu0 0.0
    %269 = vmatpush1.xpose.msra.mxu0 0.0
    %270 = vmatprep.subr.mxu0 0.0
    %271 = vmatpush1.xpose.msra.mxu0 0.0
    %272 = vmatprep.subr.mxu0 0.0
    %273 = vmatpush1.xpose.msra.mxu0 0.0
    %274 = vmatprep.subr.mxu0 0.0
    %275 = vmatpush1.xpose.msra.mxu0 0.0
    %276 = vmatprep.subr.mxu0 0.0
    %277 = vmatpush1.xpose.msra.mxu0 0.0
    %278 = vmatprep.subr.mxu0 0.0
    %279 = vmatpush1.xpose.msra.mxu0 0.0
    %280 = vmatprep.subr.mxu0 0.0
    %281 = vmatpush1.xpose.msra.mxu0 0.0
    %282 = vmatprep.subr.mxu0 0.0
    %283 = vmatpush1.xpose.msra.mxu0 0.0
    %284 = vmatprep.subr.mxu0 0.0
    %285 = vmatpush1.xpose.msra.mxu0 0.0
    %286 = vmatprep.subr.mxu0 0.0
    %287 = vmatpush1.xpose.msra.mxu0 0.0
    %288 = vmatprep.subr.mxu0 0.0
    %289 = vmatpush1.xpose.msra.mxu0 0.0
    %290 = vmatprep.subr.mxu0 0.0
    %291 = vmatpush1.xpose.msra.mxu0 0.0
    %292 = vmatprep.subr.mxu0 0.0
    %293 = vmatpush1.xpose.msra.mxu0 0.0
    %294 = vmatprep.subr.mxu0 0.0
    %295 = vmatpush1.xpose.msra.mxu0 0.0
    %296 = vmatprep.subr.mxu0 0.0
    %297 = vmatpush1.xpose.msra.mxu0 0.0
    %298 = vmatprep.subr.mxu0 0.0
    %299 = vmatpush1.xpose.msra.mxu0 0.0
    %300 = vmatprep.subr.mxu0 0.0
    %301 = vmatpush1.xpose.msra.mxu0 0.0
    %302 = vmatprep.subr.mxu0 0.0
    %303 = vmatpush1.xpose.msra.mxu0 0.0
    %304 = vmatprep.subr.mxu0 0.0
    %305 = vmatpush1.xpose.msra.mxu0 0.0
    %306 = vmatprep.subr.mxu0 0.0
    %307 = vmatpush1.xpose.msra.mxu0 0.0
    %308 = vmatprep.subr.mxu0 0.0
    %309 = vmatpush1.xpose.msra.mxu0 0.0
    %310 = vmatprep.subr.mxu0 0.0
    %311 = vmatpush1.xpose.msra.mxu0 0.0
    %312 = vmatprep.subr.mxu0 0.0
    %313 = vmatpush1.xpose.msra.mxu0 0.0
    %314 = vmatprep.subr.mxu0 0.0
    %315 = vmatpush1.xpose.msra.mxu0 0.0
    %316 = vmatprep.mubr.f32.mxu0 0.0
    %317 = vmatmul.mubr.f32.gmra.mrb[0].mxu0 %v248
    %v318 = vpop.f32.mrb[0].mxu0
    %v319 = vadd.f32 0.0, %v318
    %v320 = vpop.f32.mrb[0].mxu0
    %321 = vdwg.mxu0
    %v322 = vsel %vm232, %v319, -inf
    %323 = vmax.xlane.f32.xlu0 %v322
    %v324 = vpop.xlane.xlu0 %323
    %v325 = vsub.f32 %v319, %v324
    %v326 = vmul.f32 %v325, 1.442695
    %v327 = vpow.pop %v326
    %v328 = vsel %vm232, %v327, 0.0
    %329 = vadd.xlane.f32.xlu0 %v328
    %v330 = vpop.xlane.xlu0 %329
    %v331 = vrcp.pop %v330
    %v332 = vmul.f32 %v327, %v331
    %333 = vrot.lane.b32.xlu0 %v146, 32
    %v334 = vpop.permute.xlu0 %333
    %v337 = vsel %vm232, %v332, 0
    %339 = vmatprep.subr.mxu0 0.0
    %340 = vmatpush1.msra.mxu0 %v334
    %341 = vmatprep.subr.mxu0 0.0
    %342 = vmatpush1.msra.mxu0 0.0
    %343 = vmatprep.subr.mxu0 0.0
    %344 = vmatpush1.msra.mxu0 0.0
    %345 = vmatprep.subr.mxu0 0.0
    %346 = vmatpush1.msra.mxu0 0.0
    %347 = vmatprep.subr.mxu0 0.0
    %348 = vmatpush1.msra.mxu0 0.0
    %349 = vmatprep.subr.mxu0 0.0
    %350 = vmatpush1.msra.mxu0 0.0
    %351 = vmatprep.subr.mxu0 0.0
    %352 = vmatpush1.msra.mxu0 0.0
    %353 = vmatprep.subr.mxu0 0.0
    %354 = vmatpush1.msra.mxu0 0.0
    %355 = vmatprep.subr.mxu0 0.0
    %356 = vmatpush1.msra.mxu0 0.0
    %357 = vmatprep.subr.mxu0 0.0
    %358 = vmatpush1.msra.mxu0 0.0
    %359 = vmatprep.subr.mxu0 0.0
    %360 = vmatpush1.msra.mxu0 0.0
    %361 = vmatprep.subr.mxu0 0.0
    %362 = vmatpush1.msra.mxu0 0.0
    %363 = vmatprep.subr.mxu0 0.0
    %364 = vmatpush1.msra.mxu0 0.0
    %365 = vmatprep.subr.mxu0 0.0
    %366 = vmatpush1.msra.mxu0 0.0
    %367 = vmatprep.subr.mxu0 0.0
    %368 = vmatpush1.msra.mxu0 0.0
    %369 = vmatprep.subr.mxu0 0.0
    %370 = vmatpush1.msra.mxu0 0.0
    %371 = vmatprep.subr.mxu0 0.0
    %372 = vmatpush1.msra.mxu0 0.0
    %373 = vmatprep.subr.mxu0 0.0
    %374 = vmatpush1.msra.mxu0 0.0
    %375 = vmatprep.subr.mxu0 0.0
    %376 = vmatpush1.msra.mxu0 0.0
    %377 = vmatprep.subr.mxu0 0.0
    %378 = vmatpush1.msra.mxu0 0.0
    %379 = vmatprep.subr.mxu0 0.0
    %380 = vmatpush1.msra.mxu0 0.0
    %381 = vmatprep.subr.mxu0 0.0
    %382 = vmatpush1.msra.mxu0 0.0
    %383 = vmatprep.subr.mxu0 0.0
    %384 = vmatpush1.msra.mxu0 0.0
    %385 = vmatprep.subr.mxu0 0.0
    %386 = vmatpush1.msra.mxu0 0.0
    %387 = vmatprep.subr.mxu0 0.0
    %388 = vmatpush1.msra.mxu0 0.0
    %389 = vmatprep.subr.mxu0 0.0
    %390 = vmatpush1.msra.mxu0 0.0
    %391 = vmatprep.subr.mxu0 0.0
    %392 = vmatpush1.msra.mxu0 0.0
    %393 = vmatprep.subr.mxu0 0.0
    %394 = vmatpush1.msra.mxu0 0.0
    %395 = vmatprep.subr.mxu0 0.0
    %396 = vmatpush1.msra.mxu0 0.0
    %397 = vmatprep.subr.mxu0 0.0
    %398 = vmatpush1.msra.mxu0 0.0
    %399 = vmatprep.subr.mxu0 0.0
    %400 = vmatpush1.msra.mxu0 0.0
    %401 = vmatprep.subr.mxu0 0.0
    %402 = vmatpush1.msra.mxu0 0.0
    %403 = vmatprep.mubr.f32.mxu0 0.0
    %404 = vmatmul.mubr.f32.gmra.mrb[0].mxu0 %v337
    %v405 = vpop.f32.mrb[0].mxu0
    %v406 = vadd.f32 0.0, %v405
    %v407 = vpop.f32.mrb[0].mxu0
    %408 = vdwg.mxu0
    %409 = vrot.lane.b32.xlu0 %v146, 64
    %v410 = vpop.permute.xlu0 %409
    %v413 = vsel %vm232, %v243, 0
    %415 = vmatprep.subr.mxu0 0.0
    %416 = vmatpush1.msra.mxu0 %v410
    %417 = vmatprep.subr.mxu0 0.0
    %418 = vmatpush1.msra.mxu0 0.0
    %419 = vmatprep.subr.mxu0 0.0
    %420 = vmatpush1.msra.mxu0 0.0
    %421 = vmatprep.subr.mxu0 0.0
    %422 = vmatpush1.msra.mxu0 0.0
    %423 = vmatprep.subr.mxu0 0.0
    %424 = vmatpush1.msra.mxu0 0.0
    %425 = vmatprep.subr.mxu0 0.0
    %426 = vmatpush1.msra.mxu0 0.0
    %427 = vmatprep.subr.mxu0 0.0
    %428 = vmatpush1.msra.mxu0 0.0
    %429 = vmatprep.subr.mxu0 0.0
    %430 = vmatpush1.msra.mxu0 0.0
    %431 = vmatprep.subr.mxu0 0.0
    %432 = vmatpush1.msra.mxu0 0.0
    %433 = vmatprep.subr.mxu0 0.0
    %434 = vmatpush1.msra.mxu0 0.0
    %435 = vmatprep.subr.mxu0 0.0
    %436 = vmatpush1.msra.mxu0 0.0
    %437 = vmatprep.subr.mxu0 0.0
    %438 = vmatpush1.msra.mxu0 0.0
    %439 = vmatprep.subr.mxu0 0.0
    %440 = vmatpush1.msra.mxu0 0.0
    %441 = vmatprep.subr.mxu0 0.0
    %442 = vmatpush1.msra.mxu0 0.0
    %443 = vmatprep.subr.mxu0 0.0
    %444 = vmatpush1.msra.mxu0 0.0
    %445 = vmatprep.subr.mxu0 0.0
    %446 = vmatpush1.msra.mxu0 0.0
    %447 = vmatprep.subr.mxu0 0.0
    %448 = vmatpush1.msra.mxu0 0.0
    %449 = vmatprep.subr.mxu0 0.0
    %450 = vmatpush1.msra.mxu0 0.0
    %451 = vmatprep.subr.mxu0 0.0
    %452 = vmatpush1.msra.mxu0 0.0
    %453 = vmatprep.subr.mxu0 0.0
    %454 = vmatpush1.msra.mxu0 0.0
    %455 = vmatprep.subr.mxu0 0.0
    %456 = vmatpush1.msra.mxu0 0.0
    %457 = vmatprep.subr.mxu0 0.0
    %458 = vmatpush1.msra.mxu0 0.0
    %459 = vmatprep.subr.mxu0 0.0
    %460 = vmatpush1.msra.mxu0 0.0
    %461 = vmatprep.subr.mxu0 0.0
    %462 = vmatpush1.msra.mxu0 0.0
    %463 = vmatprep.subr.mxu0 0.0
    %464 = vmatpush1.msra.mxu0 0.0
    %465 = vmatprep.subr.mxu0 0.0
    %466 = vmatpush1.msra.mxu0 0.0
    %467 = vmatprep.subr.mxu0 0.0
    %468 = vmatpush1.msra.mxu0 0.0
    %469 = vmatprep.subr.mxu0 0.0
    %470 = vmatpush1.msra.mxu0 0.0
    %471 = vmatprep.subr.mxu0 0.0
    %472 = vmatpush1.msra.mxu0 0.0
    %473 = vmatprep.subr.mxu0 0.0
    %474 = vmatpush1.msra.mxu0 0.0
    %475 = vmatprep.subr.mxu0 0.0
    %476 = vmatpush1.msra.mxu0 0.0
    %477 = vmatprep.subr.mxu0 0.0
    %478 = vmatpush1.msra.mxu0 0.0
    %479 = vmatprep.mubr.f32.mxu0 0.0
    %480 = vmatmul.mubr.f32.gmra.mrb[0].mxu0 %v413
    %v481 = vpop.f32.mrb[0].mxu0
    %v482 = vadd.f32 %v406, %v481
    %v483 = vpop.f32.mrb[0].mxu0
    %484 = vdwg.mxu0
    %485 = vst.msk [vmem:[#allocation7] sm:$0xff] %vm47, %v482
    %487 = vrot.lane.b32.xlu0 %v151, 96
    %v488 = vpop.permute.xlu0 %487
    %v489 = vsel %vm157, %v151, 0
    %v491 = vsel %vm157, %v488, 0
    %493 = vmatprep.subr.mxu0 0.0
    %494 = vmatpush1.xpose.msra.mxu0 %v491
    %495 = vmatprep.subr.mxu0 0.0
    %496 = vmatpush1.xpose.msra.mxu0 0.0
    %497 = vmatprep.subr.mxu0 0.0
    %498 = vmatpush1.xpose.msra.mxu0 0.0
    %499 = vmatprep.subr.mxu0 0.0
    %500 = vmatpush1.xpose.msra.mxu0 0.0
    %501 = vmatprep.subr.mxu0 0.0
    %502 = vmatpush1.xpose.msra.mxu0 0.0
    %503 = vmatprep.subr.mxu0 0.0
    %504 = vmatpush1.xpose.msra.mxu0 0.0
    %505 = vmatprep.subr.mxu0 0.0
    %506 = vmatpush1.xpose.msra.mxu0 0.0
    %507 = vmatprep.subr.mxu0 0.0
    %508 = vmatpush1.xpose.msra.mxu0 0.0
    %509 = vmatprep.subr.mxu0 0.0
    %510 = vmatpush1.xpose.msra.mxu0 0.0
    %511 = vmatprep.subr.mxu0 0.0
    %512 = vmatpush1.xpose.msra.mxu0 0.0
    %513 = vmatprep.subr.mxu0 0.0
    %514 = vmatpush1.xpose.msra.mxu0 0.0
    %515 = vmatprep.subr.mxu0 0.0
    %516 = vmatpush1.xpose.msra.mxu0 0.0
    %517 = vmatprep.subr.mxu0 0.0
    %518 = vmatpush1.xpose.msra.mxu0 0.0
    %519 = vmatprep.subr.mxu0 0.0
    %520 = vmatpush1.xpose.msra.mxu0 0.0
    %521 = vmatprep.subr.mxu0 0.0
    %522 = vmatpush1.xpose.msra.mxu0 0.0
    %523 = vmatprep.subr.mxu0 0.0
    %524 = vmatpush1.xpose.msra.mxu0 0.0
    %525 = vmatprep.subr.mxu0 0.0
    %526 = vmatpush1.xpose.msra.mxu0 0.0
    %527 = vmatprep.subr.mxu0 0.0
    %528 = vmatpush1.xpose.msra.mxu0 0.0
    %529 = vmatprep.subr.mxu0 0.0
    %530 = vmatpush1.xpose.msra.mxu0 0.0
    %531 = vmatprep.subr.mxu0 0.0
    %532 = vmatpush1.xpose.msra.mxu0 0.0
    %533 = vmatprep.subr.mxu0 0.0
    %534 = vmatpush1.xpose.msra.mxu0 0.0
    %535 = vmatprep.subr.mxu0 0.0
    %536 = vmatpush1.xpose.msra.mxu0 0.0
    %537 = vmatprep.subr.mxu0 0.0
    %538 = vmatpush1.xpose.msra.mxu0 0.0
    %539 = vmatprep.subr.mxu0 0.0
    %540 = vmatpush1.xpose.msra.mxu0 0.0
    %541 = vmatprep.subr.mxu0 0.0
    %542 = vmatpush1.xpose.msra.mxu0 0.0
    %543 = vmatprep.subr.mxu0 0.0
    %544 = vmatpush1.xpose.msra.mxu0 0.0
    %545 = vmatprep.subr.mxu0 0.0
    %546 = vmatpush1.xpose.msra.mxu0 0.0
    %547 = vmatprep.subr.mxu0 0.0
    %548 = vmatpush1.xpose.msra.mxu0 0.0
    %549 = vmatprep.subr.mxu0 0.0
    %550 = vmatpush1.xpose.msra.mxu0 0.0
    %551 = vmatprep.subr.mxu0 0.0
    %552 = vmatpush1.xpose.msra.mxu0 0.0
    %553 = vmatprep.subr.mxu0 0.0
    %554 = vmatpush1.xpose.msra.mxu0 0.0
    %555 = vmatprep.subr.mxu0 0.0
    %556 = vmatpush1.xpose.msra.mxu0 0.0
    %557 = vmatprep.mubr.f32.mxu0 0.0
    %558 = vmatmul.mubr.f32.gmra.mrb[0].mxu0 %v489
    %v559 = vpop.f32.mrb[0].mxu0
    %v560 = vadd.f32 0.0, %v559
    %v561 = vpop.f32.mrb[0].mxu0
    %562 = vdwg.mxu0
    %v563 = vsel %vm232, %v560, -inf
    %564 = vmax.xlane.f32.xlu0 %v563
    %v565 = vpop.xlane.xlu0 %564
    %v566 = vsub.f32 %v560, %v565
    %v567 = vmul.f32 %v566, 1.442695
    %v568 = vpow.pop %v567
    %v569 = vsel %vm232, %v568, 0.0
    %570 = vadd.xlane.f32.xlu0 %v569
    %v571 = vpop.xlane.xlu0 %570
    %v572 = vrcp.pop %v571
    %v573 = vmul.f32 %v568, %v572
    %574 = vrot.lane.b32.xlu0 %v151, 112
    %v575 = vpop.permute.xlu0 %574
    %576 = vrot.lane.b32.xlu0 %v151, 80
    %v577 = vpop.permute.xlu0 %576
    %v578 = vsel %vm157, %v575, 0
    %v580 = vsel %vm157, %v577, 0
    %582 = vmatprep.subr.mxu0 0.0
    %583 = vmatpush1.xpose.msra.mxu0 %v580
    %584 = vmatprep.subr.mxu0 0.0
    %585 = vmatpush1.xpose.msra.mxu0 0.0
    %586 = vmatprep.subr.mxu0 0.0
    %587 = vmatpush1.xpose.msra.mxu0 0.0
    %588 = vmatprep.subr.mxu0 0.0
    %589 = vmatpush1.xpose.msra.mxu0 0.0
    %590 = vmatprep.subr.mxu0 0.0
    %591 = vmatpush1.xpose.msra.mxu0 0.0
    %592 = vmatprep.subr.mxu0 0.0
    %593 = vmatpush1.xpose.msra.mxu0 0.0
    %594 = vmatprep.subr.mxu0 0.0
    %595 = vmatpush1.xpose.msra.mxu0 0.0
    %596 = vmatprep.subr.mxu0 0.0
    %597 = vmatpush1.xpose.msra.mxu0 0.0
    %598 = vmatprep.subr.mxu0 0.0
    %599 = vmatpush1.xpose.msra.mxu0 0.0
    %600 = vmatprep.subr.mxu0 0.0
    %601 = vmatpush1.xpose.msra.mxu0 0.0
    %602 = vmatprep.subr.mxu0 0.0
    %603 = vmatpush1.xpose.msra.mxu0 0.0
    %604 = vmatprep.subr.mxu0 0.0
    %605 = vmatpush1.xpose.msra.mxu0 0.0
    %606 = vmatprep.subr.mxu0 0.0
    %607 = vmatpush1.xpose.msra.mxu0 0.0
    %608 = vmatprep.subr.mxu0 0.0
    %609 = vmatpush1.xpose.msra.mxu0 0.0
    %610 = vmatprep.subr.mxu0 0.0
    %611 = vmatpush1.xpose.msra.mxu0 0.0
    %612 = vmatprep.subr.mxu0 0.0
    %613 = vmatpush1.xpose.msra.mxu0 0.0
    %614 = vmatprep.subr.mxu0 0.0
    %615 = vmatpush1.xpose.msra.mxu0 0.0
    %616 = vmatprep.subr.mxu0 0.0
    %617 = vmatpush1.xpose.msra.mxu0 0.0
    %618 = vmatprep.subr.mxu0 0.0
    %619 = vmatpush1.xpose.msra.mxu0 0.0
    %620 = vmatprep.subr.mxu0 0.0
    %621 = vmatpush1.xpose.msra.mxu0 0.0
    %622 = vmatprep.subr.mxu0 0.0
    %623 = vmatpush1.xpose.msra.mxu0 0.0
    %624 = vmatprep.subr.mxu0 0.0
    %625 = vmatpush1.xpose.msra.mxu0 0.0
    %626 = vmatprep.subr.mxu0 0.0
    %627 = vmatpush1.xpose.msra.mxu0 0.0
    %628 = vmatprep.subr.mxu0 0.0
    %629 = vmatpush1.xpose.msra.mxu0 0.0
    %630 = vmatprep.subr.mxu0 0.0
    %631 = vmatpush1.xpose.msra.mxu0 0.0
    %632 = vmatprep.subr.mxu0 0.0
    %633 = vmatpush1.xpose.msra.mxu0 0.0
    %634 = vmatprep.subr.mxu0 0.0
    %635 = vmatpush1.xpose.msra.mxu0 0.0
    %636 = vmatprep.subr.mxu0 0.0
    %637 = vmatpush1.xpose.msra.mxu0 0.0
    %638 = vmatprep.subr.mxu0 0.0
    %639 = vmatpush1.xpose.msra.mxu0 0.0
    %640 = vmatprep.subr.mxu0 0.0
    %641 = vmatpush1.xpose.msra.mxu0 0.0
    %642 = vmatprep.subr.mxu0 0.0
    %643 = vmatpush1.xpose.msra.mxu0 0.0
    %644 = vmatprep.subr.mxu0 0.0
    %645 = vmatpush1.xpose.msra.mxu0 0.0
    %646 = vmatprep.mubr.f32.mxu0 0.0
    %647 = vmatmul.mubr.f32.gmra.mrb[0].mxu0 %v578
    %v648 = vpop.f32.mrb[0].mxu0
    %v649 = vadd.f32 0.0, %v648
    %v650 = vpop.f32.mrb[0].mxu0
    %651 = vdwg.mxu0
    %v652 = vsel %vm232, %v649, -inf
    %653 = vmax.xlane.f32.xlu0 %v652
    %v654 = vpop.xlane.xlu0 %653
    %v655 = vsub.f32 %v649, %v654
    %v656 = vmul.f32 %v655, 1.442695
    %v657 = vpow.pop %v656
    %v658 = vsel %vm232, %v657, 0.0
    %659 = vadd.xlane.f32.xlu0 %v658
    %v660 = vpop.xlane.xlu0 %659
    %v661 = vrcp.pop %v660
    %v662 = vmul.f32 %v657, %v661
    %663 = vrot.lane.b32.xlu0 %v151, 32
    %v664 = vpop.permute.xlu0 %663
    %v667 = vsel %vm232, %v662, 0
    %669 = vmatprep.subr.mxu0 0.0
    %670 = vmatpush1.msra.mxu0 %v664
    %671 = vmatprep.subr.mxu0 0.0
    %672 = vmatpush1.msra.mxu0 0.0
    %673 = vmatprep.subr.mxu0 0.0
    %674 = vmatpush1.msra.mxu0 0.0
    %675 = vmatprep.subr.mxu0 0.0
    %676 = vmatpush1.msra.mxu0 0.0
    %677 = vmatprep.subr.mxu0 0.0
    %678 = vmatpush1.msra.mxu0 0.0
    %679 = vmatprep.subr.mxu0 0.0
    %680 = vmatpush1.msra.mxu0 0.0
    %681 = vmatprep.subr.mxu0 0.0
    %682 = vmatpush1.msra.mxu0 0.0
    %683 = vmatprep.subr.mxu0 0.0
    %684 = vmatpush1.msra.mxu0 0.0
    %685 = vmatprep.subr.mxu0 0.0
    %686 = vmatpush1.msra.mxu0 0.0
    %687 = vmatprep.subr.mxu0 0.0
    %688 = vmatpush1.msra.mxu0 0.0
    %689 = vmatprep.subr.mxu0 0.0
    %690 = vmatpush1.msra.mxu0 0.0
    %691 = vmatprep.subr.mxu0 0.0
    %692 = vmatpush1.msra.mxu0 0.0
    %693 = vmatprep.subr.mxu0 0.0
    %694 = vmatpush1.msra.mxu0 0.0
    %695 = vmatprep.subr.mxu0 0.0
    %696 = vmatpush1.msra.mxu0 0.0
    %697 = vmatprep.subr.mxu0 0.0
    %698 = vmatpush1.msra.mxu0 0.0
    %699 = vmatprep.subr.mxu0 0.0
    %700 = vmatpush1.msra.mxu0 0.0
    %701 = vmatprep.subr.mxu0 0.0
    %702 = vmatpush1.msra.mxu0 0.0
    %703 = vmatprep.subr.mxu0 0.0
    %704 = vmatpush1.msra.mxu0 0.0
    %705 = vmatprep.subr.mxu0 0.0
    %706 = vmatpush1.msra.mxu0 0.0
    %707 = vmatprep.subr.mxu0 0.0
    %708 = vmatpush1.msra.mxu0 0.0
    %709 = vmatprep.subr.mxu0 0.0
    %710 = vmatpush1.msra.mxu0 0.0
    %711 = vmatprep.subr.mxu0 0.0
    %712 = vmatpush1.msra.mxu0 0.0
    %713 = vmatprep.subr.mxu0 0.0
    %714 = vmatpush1.msra.mxu0 0.0
    %715 = vmatprep.subr.mxu0 0.0
    %716 = vmatpush1.msra.mxu0 0.0
    %717 = vmatprep.subr.mxu0 0.0
    %718 = vmatpush1.msra.mxu0 0.0
    %719 = vmatprep.subr.mxu0 0.0
    %720 = vmatpush1.msra.mxu0 0.0
    %721 = vmatprep.subr.mxu0 0.0
    %722 = vmatpush1.msra.mxu0 0.0
    %723 = vmatprep.subr.mxu0 0.0
    %724 = vmatpush1.msra.mxu0 0.0
    %725 = vmatprep.subr.mxu0 0.0
    %726 = vmatpush1.msra.mxu0 0.0
    %727 = vmatprep.subr.mxu0 0.0
    %728 = vmatpush1.msra.mxu0 0.0
    %729 = vmatprep.subr.mxu0 0.0
    %730 = vmatpush1.msra.mxu0 0.0
    %731 = vmatprep.subr.mxu0 0.0
    %732 = vmatpush1.msra.mxu0 0.0
    %733 = vmatprep.mubr.f32.mxu0 0.0
    %734 = vmatmul.mubr.f32.gmra.mrb[0].mxu0 %v667
    %v735 = vpop.f32.mrb[0].mxu0
    %v736 = vadd.f32 0.0, %v735
    %v737 = vpop.f32.mrb[0].mxu0
    %738 = vdwg.mxu0
    %739 = vrot.lane.b32.xlu0 %v151, 64
    %v740 = vpop.permute.xlu0 %739
    %v743 = vsel %vm232, %v573, 0
    %745 = vmatprep.subr.mxu0 0.0
    %746 = vmatpush1.msra.mxu0 %v740
    %747 = vmatprep.subr.mxu0 0.0
    %748 = vmatpush1.msra.mxu0 0.0
    %749 = vmatprep.subr.mxu0 0.0
    %750 = vmatpush1.msra.mxu0 0.0
    %751 = vmatprep.subr.mxu0 0.0
    %752 = vmatpush1.msra.mxu0 0.0
    %753 = vmatprep.subr.mxu0 0.0
    %754 = vmatpush1.msra.mxu0 0.0
    %755 = vmatprep.subr.mxu0 0.0
    %756 = vmatpush1.msra.mxu0 0.0
    %757 = vmatprep.subr.mxu0 0.0
    %758 = vmatpush1.msra.mxu0 0.0
    %759 = vmatprep.subr.mxu0 0.0
    %760 = vmatpush1.msra.mxu0 0.0
    %761 = vmatprep.subr.mxu0 0.0
    %762 = vmatpush1.msra.mxu0 0.0
    %763 = vmatprep.subr.mxu0 0.0
    %764 = vmatpush1.msra.mxu0 0.0
    %765 = vmatprep.subr.mxu0 0.0
    %766 = vmatpush1.msra.mxu0 0.0
    %767 = vmatprep.subr.mxu0 0.0
    %768 = vmatpush1.msra.mxu0 0.0
    %769 = vmatprep.subr.mxu0 0.0
    %770 = vmatpush1.msra.mxu0 0.0
    %771 = vmatprep.subr.mxu0 0.0
    %772 = vmatpush1.msra.mxu0 0.0
    %773 = vmatprep.subr.mxu0 0.0
    %774 = vmatpush1.msra.mxu0 0.0
    %775 = vmatprep.subr.mxu0 0.0
    %776 = vmatpush1.msra.mxu0 0.0
    %777 = vmatprep.subr.mxu0 0.0
    %778 = vmatpush1.msra.mxu0 0.0
    %779 = vmatprep.subr.mxu0 0.0
    %780 = vmatpush1.msra.mxu0 0.0
    %781 = vmatprep.subr.mxu0 0.0
    %782 = vmatpush1.msra.mxu0 0.0
    %783 = vmatprep.subr.mxu0 0.0
    %784 = vmatpush1.msra.mxu0 0.0
    %785 = vmatprep.subr.mxu0 0.0
    %786 = vmatpush1.msra.mxu0 0.0
    %787 = vmatprep.subr.mxu0 0.0
    %788 = vmatpush1.msra.mxu0 0.0
    %789 = vmatprep.subr.mxu0 0.0
    %790 = vmatpush1.msra.mxu0 0.0
    %791 = vmatprep.subr.mxu0 0.0
    %792 = vmatpush1.msra.mxu0 0.0
    %793 = vmatprep.subr.mxu0 0.0
    %794 = vmatpush1.msra.mxu0 0.0
    %795 = vmatprep.subr.mxu0 0.0
    %796 = vmatpush1.msra.mxu0 0.0
    %797 = vmatprep.subr.mxu0 0.0
    %798 = vmatpush1.msra.mxu0 0.0
    %799 = vmatprep.subr.mxu0 0.0
    %800 = vmatpush1.msra.mxu0 0.0
    %801 = vmatprep.subr.mxu0 0.0
    %802 = vmatpush1.msra.mxu0 0.0
    %803 = vmatprep.subr.mxu0 0.0
    %804 = vmatpush1.msra.mxu0 0.0
    %805 = vmatprep.subr.mxu0 0.0
    %806 = vmatpush1.msra.mxu0 0.0
    %807 = vmatprep.subr.mxu0 0.0
    %808 = vmatpush1.msra.mxu0 0.0
    %809 = vmatprep.mubr.f32.mxu0 0.0
    %810 = vmatmul.mubr.f32.gmra.mrb[0].mxu0 %v743
    %v811 = vpop.f32.mrb[0].mxu0
    %v812 = vadd.f32 %v736, %v811
    %v813 = vpop.f32.mrb[0].mxu0
    %814 = vdwg.mxu0
    %815 = vst.msk [vmem:[#allocation7 + $0x8] sm:$0xff] %vm47, %v812
    // Predicated region
    $region22: #{tpu_custom_call.1} parent=1 // pred_check
      _
    $region23: #{tpu_custom_call.1} parent=1 // pred_check_branch
      %817 = sbr.rel (0) target = $region25
    $region24: #{tpu_custom_call.1} parent=1 // pred_region
      %s819 = ssub.s32 256, 256
      %820 = vsyncadd [#allocation4], %s819
      %s821 = sshll.u32 [#allocation7], 4
      %s822 = int_to_ptr.vmem [resolvable:$true] %s821
      %827 = dma.vmem_to_hbm [thread:$0]  %s822, 256, %s3, [#allocation4], 128, 128, 8
    $region25: #{tpu_custom_call.1} parent=1 // pred_fallthru
      _
    // Predicated region
    $region26: #{tpu_custom_call.1} parent=1 // pred_check
      _
    $region27: #{tpu_custom_call.1} parent=1 // pred_check_branch
      %829 = sbr.rel (0) target = $region29
    $region28: #{tpu_custom_call.1} parent=1 // pred_region
      %830 = dma.done [#allocation4], 256
    $region29: #{tpu_custom_call.1} parent=1 // pred_fallthru
      _
    %831 = vsyncpa [#allocation3], 1
    %832 = vsyncpa [#allocation6], 1
    %833 = vsyncpa [#allocation4], 1

</llo_original>
